<compile_context>
chip_gen: v7x
topology: tpu7x:2x2x1
jax: 0.10.0
libtpu: 0.0.40
codegen_flags: <defaults>
</compile_context>

<pallas_src>
import functools

import jax
import jax.numpy as jnp
from jax.experimental import pallas as pl
from jax.experimental.pallas import tpu as pltpu


def _router_kernel(x_ref, pos_ref, beh_ref, *, pad_id, eos_id, num_positions,
                   seq_len, moe_behavior_only):
    """One [S, TB] tile: sequence on sublanes, batch on lanes. Pure int VPU/XLU."""
    P = num_positions
    S = seq_len
    x = x_ref[...]                                           # [S, TB] int32

    row = jax.lax.broadcasted_iota(jnp.int32, x.shape, 0)    # sequence position
    interior = (row >= 1) & (row <= S - 2)
    d = (row + (P - 1)) % P        # == (row - 1) % P for interior rows (>= 0)

    # ---- position index (stored as int8: values are 0..P <= 4) -------------
    if moe_behavior_only:
        pre = jnp.where(d == 0, 1, 2)          # torch base [0,1,1,1]+1 (P == 4)
    else:
        pre = d + 1                            # pattern 1,2,...,P
    not_special = jnp.logical_not((x == pad_id) | (x == eos_id))
    pos_ref[...] = jnp.where(interior & not_special, pre, 0).astype(pos_ref.dtype)

    # ---- behavior tokens ----------------------------------------------------
    # g[j, b] = x[j - d, b] = x[1 + ((j-1)//P)*P, b] (the item block's behavior
    # row), built from P-1 static sublane rolls + selects
    # (jnp.roll semantics: roll(x, s)[j] = x[j-s]).
    g = x
    for shift in range(1, P):
        g = jnp.where(d == shift, jnp.roll(x, shift, axis=0), g)
    keep = interior & (d != 0)                 # zero behavior columns + edges
    beh_ref[...] = jnp.where(keep & (g != eos_id), g, 0).astype(jnp.int32)


class PBAEncoderRouterPallas:
    """JAX/Pallas equivalent of PBAEncoderRouter."""

    LANE = 128        # lane width; lane tiles are multiples of this (or == B)
    MAX_TB = 16384    # max lanes per grid step (~2.7 MB HBM traffic per step)

    def __init__(self, num_items, num_positions=4, num_behavior=4,
                 eos_token_id=1, pad_token_id=0, moe_behavior_only=False):
        self.num_items = int(num_items)
        self.num_positions = int(num_positions)
        self.num_behavior = int(num_behavior)
        self.eos = int(eos_token_id)
        self.pad = int(pad_token_id)
        self.moe_behavior_only = bool(moe_behavior_only)
        self.seq_len = self.num_items * self.num_positions + 2
        if self.moe_behavior_only:
            # The PyTorch reference hard-codes a length-4 base ([0,1,1,1]+1) in
            # this mode; it is only coherent for num_positions == 4.
            assert self.num_positions == 4, \
                "Moe_behavior_only reference semantics require num_positions == 4"

        # Kept for reference / external consumers (not used by the kernel).
        P = self.num_positions
        if self.moe_behavior_only:
            base = jnp.array([0, 1, 1, 1], dtype=jnp.int32) + 1
        else:
            base = jnp.arange(P, dtype=jnp.int32) + 1
        self.pre_generated_position_index = jnp.concatenate(
            [jnp.zeros(1, jnp.int32), jnp.tile(base, self.num_items),
             jnp.zeros(1, jnp.int32)])
        self.behavior_token_indices = jnp.arange(
            0, self.num_items * P, P, dtype=jnp.int32) + 1

    # ---- tile selection -----------------------------------------------------
    def _lane_tile(self, B):
        """Largest sensible lane tile; >= 2 grid steps once B > 2*LANE so the
        'parallel' grid axis can shard across both v7x TensorCores."""
        if B <= 2 * self.LANE:
            return B                                   # one block == full array
        half = pl.cdiv((B + 1) // 2, self.LANE) * self.LANE
        return min(self.MAX_TB, half)                  # multiple of 128

    def __call__(self, input_id_sequence, return_transposed=False):
        x = input_id_sequence.astype(jnp.int32)
        B, S = x.shape
        assert S == self.seq_len, f"seq len {S} must equal {self.seq_len}"

        # Lane-dense layout: batch on lanes.  No padding: Pallas masks the
        # ragged final lane block; batch columns are independent.
        x_t = jnp.transpose(x)                               # [S, B]

        TB = self._lane_tile(B)
        grid = (pl.cdiv(B, TB),)

        kern = functools.partial(
            _router_kernel, pad_id=self.pad, eos_id=self.eos,
            num_positions=self.num_positions, seq_len=S,
            moe_behavior_only=self.moe_behavior_only)

        pos_t, beh_t = pl.pallas_call(
            kern,
            out_shape=(jax.ShapeDtypeStruct((S, B), jnp.int8),
                       jax.ShapeDtypeStruct((S, B), jnp.int32)),
            grid=grid,
            in_specs=[pl.BlockSpec((S, TB), lambda i: (0, i))],
            out_specs=(pl.BlockSpec((S, TB), lambda i: (0, i)),
                       pl.BlockSpec((S, TB), lambda i: (0, i))),
            compiler_params=pltpu.CompilerParams(
                dimension_semantics=("parallel",)),
            cost_estimate=pl.CostEstimate(
                flops=0, transcendentals=0,
                bytes_accessed=S * B * (4 + 1 + 4)),
        )(x_t)

        if return_transposed:
            # Preferred fast path: downstream consumers read [S, B] directly.
            return pos_t, beh_t

        # PyTorch [B, S] layout (pos widened back to int32 for consumers).
        pos = jnp.transpose(pos_t).astype(jnp.int32)
        beh = jnp.transpose(beh_t)
        return pos, beh


def _reference_forward(x, router: PBAEncoderRouterPallas):
    """Pure-JAX port of the PyTorch forward, for correctness checking."""
    B, S = x.shape
    P = router.num_positions
    pos = jnp.tile(router.pre_generated_position_index[None, :], (B, 1))
    pos = jnp.where((x == router.pad) | (x == router.eos), 0, pos)

    beh_tok = x[:, router.behavior_token_indices]            # [B, num_items]
    rep = jnp.repeat(beh_tok, P, axis=1)                     # [B, num_items*P]
    rep = jnp.concatenate(
        [jnp.zeros((B, 1), jnp.int32), rep, jnp.zeros((B, 1), jnp.int32)],
        axis=1)
    rep = rep.at[:, router.behavior_token_indices].set(0)
    rep = jnp.where(rep == router.eos, 0, rep)
    return pos.astype(jnp.int32), rep.astype(jnp.int32)


if __name__ == "__main__":
    num_items = 4
    num_positions = 4
    eos_id = 1
    pad_id = 0
    seq = num_items * num_positions + 2   # = 18

    router = PBAEncoderRouterPallas(
        num_items=num_items, num_positions=num_positions,
        eos_token_id=eos_id, pad_token_id=pad_id)

    key = jax.random.PRNGKey(0)

    # --- primary small test (batch=2), shape of the module's forward --------
    batch = 2
    ids = jax.random.randint(key, (batch, seq), minval=2, maxval=50,
                             dtype=jnp.int32)
    ids = ids.at[0, seq - 1].set(eos_id)
    ids = ids.at[1, seq - 2].set(eos_id)
    ids = ids.at[1, seq - 1].set(pad_id)

    pos_out, beh_out = router(ids)
    jax.block_until_ready((pos_out, beh_out))

    pos_ref, beh_ref = _reference_forward(ids.astype(jnp.int32), router)
    assert pos_out.shape == (batch, seq) and beh_out.shape == (batch, seq)
    assert pos_out.dtype == jnp.int32 and beh_out.dtype == jnp.int32
    assert jnp.array_equal(pos_out, pos_ref), "position_index mismatch"
    assert jnp.array_equal(beh_out, beh_ref), "repeat_behavior_tokens mismatch"

    # --- second test exercising a 2-step grid + masked partial lane block ---
    batch2 = 300   # -> TB=256, grid=(2,), final block has 44 valid lanes
    key2 = jax.random.PRNGKey(0)
    ids2 = jax.random.randint(key2, (batch2, seq), minval=2, maxval=50,
                              dtype=jnp.int32)
    ids2 = ids2.at[:, seq - 1].set(eos_id)
    ids2 = ids2.at[::3, seq - 2].set(eos_id)
    ids2 = ids2.at[::3, seq - 1].set(pad_id)

    pos2, beh2 = router(ids2)
    jax.block_until_ready((pos2, beh2))
    pos2_ref, beh2_ref = _reference_forward(ids2.astype(jnp.int32), router)
    assert jnp.array_equal(pos2, pos2_ref), "position_index mismatch (B=300)"
    assert jnp.array_equal(beh2, beh2_ref), "repeat_behavior_tokens mismatch (B=300)"

    print("KERNEL_OK")
</pallas_src>

<mosaic_0001>
module attributes {stable_mosaic.version = 11 : i64} {
  func.func @_router_kernel(%arg0: i32, %arg1: memref<18x2xi32, #tpu.memory_space<vmem>>, %arg2: memref<18x2xi8, #tpu.memory_space<vmem>>, %arg3: memref<18x2xi32, #tpu.memory_space<vmem>>) attributes {dimension_semantics = [#tpu.dimension_semantics<parallel>], iteration_bounds = array<i64: 1>, scalar_prefetch = 0 : i64, scratch_operands = 0 : i64, tpu.core_type = #tpu.core_type<tc>, window_params = [{transform_indices = @transform_0, window_bounds = array<i64: 18, 2>}, {transform_indices = @transform_1, window_bounds = array<i64: 18, 2>}, {transform_indices = @transform_2, window_bounds = array<i64: 18, 2>}]} {
    %c0 = arith.constant 0 : index
    %c0_0 = arith.constant 0 : index
    %0 = vector.load %arg1[%c0, %c0_0] : memref<18x2xi32, #tpu.memory_space<vmem>>, vector<18x2xi32>
    %1 = tpu.iota {dimensions = array<i32: 0>} : vector<18x2xi32>
    %c1_i32 = arith.constant 1 : i32
    %2 = vector.broadcast %c1_i32 : i32 to vector<18x2xi32>
    %3 = arith.cmpi sge, %1, %2 : vector<18x2xi32>
    %c16_i32 = arith.constant 16 : i32
    %4 = vector.broadcast %c16_i32 : i32 to vector<18x2xi32>
    %5 = arith.cmpi sle, %1, %4 : vector<18x2xi32>
    %6 = arith.andi %3, %5 : vector<18x2xi1>
    %c3_i32 = arith.constant 3 : i32
    %7 = vector.broadcast %c3_i32 : i32 to vector<18x2xi32>
    %8 = arith.addi %1, %7 : vector<18x2xi32>
    %c4_i32 = arith.constant 4 : i32
    %c0_i32 = arith.constant 0 : i32
    %9 = arith.cmpi eq, %c4_i32, %c0_i32 : i32
    %c1_i32_1 = arith.constant 1 : i32
    %10 = arith.select %9, %c1_i32_1, %c4_i32 : i32
    %11 = vector.broadcast %10 : i32 to vector<18x2xi32>
    %12 = arith.remsi %8, %11 : vector<18x2xi32>
    %c0_i32_2 = arith.constant 0 : i32
    %13 = vector.broadcast %c0_i32_2 : i32 to vector<18x2xi32>
    %14 = arith.cmpi ne, %12, %13 : vector<18x2xi32>
    %c0_i32_3 = arith.constant 0 : i32
    %15 = vector.broadcast %c0_i32_3 : i32 to vector<18x2xi32>
    %16 = arith.cmpi slt, %12, %15 : vector<18x2xi32>
    %c0_i32_4 = arith.constant 0 : i32
    %17 = arith.cmpi slt, %10, %c0_i32_4 : i32
    %18 = vector.broadcast %17 : i1 to vector<18x2xi1>
    %19 = vector.broadcast %18 : vector<18x2xi1> to vector<18x2xi1>
    %20 = arith.xori %16, %19 : vector<18x2xi1>
    %21 = arith.andi %20, %14 : vector<18x2xi1>
    %22 = vector.broadcast %10 : i32 to vector<18x2xi32>
    %23 = arith.addi %12, %22 : vector<18x2xi32>
    %24 = arith.select %21, %23, %12 : vector<18x2xi1>, vector<18x2xi32>
    %c1_i32_5 = arith.constant 1 : i32
    %25 = vector.broadcast %c1_i32_5 : i32 to vector<18x2xi32>
    %26 = arith.addi %24, %25 : vector<18x2xi32>
    %c0_i32_6 = arith.constant 0 : i32
    %27 = vector.broadcast %c0_i32_6 : i32 to vector<18x2xi32>
    %28 = arith.cmpi eq, %0, %27 : vector<18x2xi32>
    %c1_i32_7 = arith.constant 1 : i32
    %29 = vector.broadcast %c1_i32_7 : i32 to vector<18x2xi32>
    %30 = arith.cmpi eq, %0, %29 : vector<18x2xi32>
    %31 = arith.ori %28, %30 : vector<18x2xi1>
    %cst = arith.constant dense<true> : vector<18x2xi1>
    %32 = arith.xori %31, %cst : vector<18x2xi1>
    %33 = arith.andi %6, %32 : vector<18x2xi1>
    %c0_i32_8 = arith.constant 0 : i32
    %34 = vector.broadcast %c0_i32_8 : i32 to vector<18x2xi32>
    %35 = arith.select %33, %26, %34 : vector<18x2xi1>, vector<18x2xi32>
    %36 = arith.trunci %35 : vector<18x2xi32> to vector<18x2xi8>
    %c0_9 = arith.constant 0 : index
    %c0_10 = arith.constant 0 : index
    %37 = vector.load %arg2[%c0_9, %c0_10] : memref<18x2xi8, #tpu.memory_space<vmem>>, vector<18x2xi8>
    tpu.vector_store %arg2[%c0_9, %c0_10], %36 {strides = array<i32>} : memref<18x2xi8, #tpu.memory_space<vmem>>, vector<18x2xi8>,
    %c1_i32_11 = arith.constant 1 : i32
    %38 = vector.broadcast %c1_i32_11 : i32 to vector<18x2xi32>
    %39 = arith.cmpi eq, %24, %38 : vector<18x2xi32>
    %40 = vector.extract_strided_slice %0 {offsets = [17, 0], sizes = [1, 2], strides = [1, 1]} : vector<18x2xi32> to vector<1x2xi32>
    %41 = vector.extract_strided_slice %0 {offsets = [0, 0], sizes = [17, 2], strides = [1, 1]} : vector<18x2xi32> to vector<17x2xi32>
    %42 = tpu.concatenate %40, %41 in 0 : vector<1x2xi32>, vector<17x2xi32> -> vector<18x2xi32>
    %43 = arith.select %39, %42, %0 : vector<18x2xi1>, vector<18x2xi32>
    %c2_i32 = arith.constant 2 : i32
    %44 = vector.broadcast %c2_i32 : i32 to vector<18x2xi32>
    %45 = arith.cmpi eq, %24, %44 : vector<18x2xi32>
    %46 = vector.extract_strided_slice %0 {offsets = [16, 0], sizes = [2, 2], strides = [1, 1]} : vector<18x2xi32> to vector<2x2xi32>
    %47 = vector.extract_strided_slice %0 {offsets = [0, 0], sizes = [16, 2], strides = [1, 1]} : vector<18x2xi32> to vector<16x2xi32>
    %48 = tpu.concatenate %46, %47 in 0 : vector<2x2xi32>, vector<16x2xi32> -> vector<18x2xi32>
    %49 = arith.select %45, %48, %43 : vector<18x2xi1>, vector<18x2xi32>
    %c3_i32_12 = arith.constant 3 : i32
    %50 = vector.broadcast %c3_i32_12 : i32 to vector<18x2xi32>
    %51 = arith.cmpi eq, %24, %50 : vector<18x2xi32>
    %52 = vector.extract_strided_slice %0 {offsets = [15, 0], sizes = [3, 2], strides = [1, 1]} : vector<18x2xi32> to vector<3x2xi32>
    %53 = vector.extract_strided_slice %0 {offsets = [0, 0], sizes = [15, 2], strides = [1, 1]} : vector<18x2xi32> to vector<15x2xi32>
    %54 = tpu.concatenate %52, %53 in 0 : vector<3x2xi32>, vector<15x2xi32> -> vector<18x2xi32>
    %55 = arith.select %51, %54, %49 : vector<18x2xi1>, vector<18x2xi32>
    %c0_i32_13 = arith.constant 0 : i32
    %56 = vector.broadcast %c0_i32_13 : i32 to vector<18x2xi32>
    %57 = arith.cmpi ne, %24, %56 : vector<18x2xi32>
    %58 = arith.andi %6, %57 : vector<18x2xi1>
    %c1_i32_14 = arith.constant 1 : i32
    %59 = vector.broadcast %c1_i32_14 : i32 to vector<18x2xi32>
    %60 = arith.cmpi ne, %55, %59 : vector<18x2xi32>
    %61 = arith.andi %58, %60 : vector<18x2xi1>
    %c0_i32_15 = arith.constant 0 : i32
    %62 = vector.broadcast %c0_i32_15 : i32 to vector<18x2xi32>
    %63 = arith.select %61, %55, %62 : vector<18x2xi1>, vector<18x2xi32>
    %c0_16 = arith.constant 0 : index
    %c0_17 = arith.constant 0 : index
    %64 = vector.load %arg3[%c0_16, %c0_17] : memref<18x2xi32, #tpu.memory_space<vmem>>, vector<18x2xi32>
    tpu.vector_store %arg3[%c0_16, %c0_17], %63 {strides = array<i32>} : memref<18x2xi32, #tpu.memory_space<vmem>>, vector<18x2xi32>,
    return
  }
  func.func @transform_0(%arg0: i32) -> (i32, i32) {
    %c0_i32 = arith.constant 0 : i32
    %c0_i32_0 = arith.constant 0 : i32
    return %c0_i32, %arg0 : i32, i32
  }
  func.func @transform_1(%arg0: i32) -> (i32, i32) {
    %c0_i32 = arith.constant 0 : i32
    %c0_i32_0 = arith.constant 0 : i32
    return %c0_i32, %arg0 : i32, i32
  }
  func.func @transform_2(%arg0: i32) -> (i32, i32) {
    %c0_i32 = arith.constant 0 : i32
    %c0_i32_0 = arith.constant 0 : i32
    return %c0_i32, %arg0 : i32, i32
  }
}

</mosaic_0001>

<llo_original>
// kernel: tpu_custom_call.1
$region0: #{tpu_custom_call.1}
  #allocation0 [shape = 'u32[]', space=smem, size = 0x4, offset = 0x4, fixed_abs, tag = 'smem constant byte address 0x4 - core index']
  #allocation1 [shape = 'u32[144,128]{1,0:T(1,128)}', space=vmem, size = 0x12000, scoped, tag = 'internal scratch']
  %s0 = inlined_call_operand.vmem [shape: s32[18,2], index: 0, kind: input, shape index: {}]
  %s1 = inlined_call_operand.vmem [shape: s8[18,2], index: 1, kind: output, shape index: {0}]
  %s2 = inlined_call_operand.vmem [shape: s32[18,2], index: 2, kind: output, shape index: {1}]
  %3 = xla_tuple %s1, %s2
  %s4 = sld [smem:[#allocation0]]
  $region22: #{tpu_custom_call.1} parent=0
    _
  %s6 = ssub.s32 1, %s4
  %s7 = scalar_select 0, %s6, %s4
  // Predicated region
  $region2: #{tpu_custom_call.1} parent=0 // pred_check
    _
  $region3: #{tpu_custom_call.1} parent=0 // pred_check_branch
    %9 = sbr.rel (0) target = $region5
  $region4: #{tpu_custom_call.1} parent=0 // pred_region
    _
  $region5: #{tpu_custom_call.1} parent=0 // pred_fallthru
    _
  %v10 = vld [vmem:[%s0] sm:$0xff]
  %v11 = vld [vmem:[%s0 + $0x8] sm:$0xff]
  %v12 = vld [vmem:[%s0 + $0x10] sm:$0x3]
  %v13 = vlaneseq
  %v14 = vshrl.u32 %v13, 7
  %v15 = vadd.s32 %v14, 8
  %v16 = vadd.s32 %v14, 16
  %vm17 = vcmp.ge.s32.totalorder %v14, 1
  %vm18 = vcmp.ge.s32.totalorder %v15, 1
  %vm19 = vcmp.ge.s32.totalorder %v16, 1
  %vm20 = vcmp.le.s32.totalorder %v14, 16
  %vm21 = vcmp.le.s32.totalorder %v15, 16
  %vm22 = vcmp.le.s32.totalorder %v16, 16
  %vm23 = vmand %vm17, %vm20
  %vm24 = vmand %vm18, %vm21
  %vm25 = vmand %vm19, %vm22
  %v26 = vadd.s32 %v14, 3
  %v27 = vadd.s32 %v15, 3
  %v28 = vadd.s32 %v16, 3
  %vm29 = vcmp.lt.s32.totalorder %v26, 0
  %v30 = vsub.s32 0, %v26
  %v31 = vsel %vm29, %v30, %v26
  %v32 = vshrl.u32 %v31, 2
  %v33 = vand.u32 %v31, 3
  %v34 = vsub.s32 0, %v33
  %v35 = vsel %vm29, %v34, %v33
  %vm36 = vcmp.lt.s32.totalorder %v27, 0
  %v37 = vsub.s32 0, %v27
  %v38 = vsel %vm36, %v37, %v27
  %v39 = vshrl.u32 %v38, 2
  %v40 = vand.u32 %v38, 3
  %v41 = vsub.s32 0, %v40
  %v42 = vsel %vm36, %v41, %v40
  %vm43 = vcmp.lt.s32.totalorder %v28, 0
  %v44 = vsub.s32 0, %v28
  %v45 = vsel %vm43, %v44, %v28
  %v46 = vshrl.u32 %v45, 2
  %v47 = vand.u32 %v45, 3
  %v48 = vsub.s32 0, %v47
  %v49 = vsel %vm43, %v48, %v47
  %vm50 = vcmp.ne.s32.totalorder %v35, 0
  %vm51 = vcmp.ne.s32.totalorder %v42, 0
  %vm52 = vcmp.ne.s32.totalorder %v49, 0
  %vm53 = vcmp.lt.s32.totalorder %v35, 0
  %vm54 = vcmp.lt.s32.totalorder %v42, 0
  %vm55 = vcmp.lt.s32.totalorder %v49, 0
  %vm56 = vmand %vm53, %vm50
  %vm57 = vmand %vm54, %vm51
  %vm58 = vmand %vm55, %vm52
  %v59 = vadd.s32 %v35, 4
  %v60 = vadd.s32 %v42, 4
  %v61 = vadd.s32 %v49, 4
  %v62 = vsel %vm56, %v59, %v35
  %v63 = vsel %vm57, %v60, %v42
  %v64 = vsel %vm58, %v61, %v49
  %v65 = vadd.s32 %v62, 1
  %v66 = vadd.s32 %v63, 1
  %v67 = vadd.s32 %v64, 1
  %vm68 = vcmp.eq.s32.totalorder %v10, 0
  %vm69 = vcmp.eq.s32.totalorder %v11, 0
  %vm70 = vcmp.eq.s32.totalorder %v12, 0
  %vm71 = vcmp.eq.s32.totalorder %v10, 1
  %vm72 = vcmp.eq.s32.totalorder %v11, 1
  %vm73 = vcmp.eq.s32.totalorder %v12, 1
  %vm74 = vmor %vm68, %vm71
  %vm75 = vmor %vm69, %vm72
  %vm76 = vmor %vm70, %vm73
  %vm77 = vmxor %vm74, 1
  %vm78 = vmxor %vm75, 1
  %vm79 = vmxor %vm76, 1
  %vm80 = vmand %vm23, %vm77
  %vm81 = vmand %vm24, %vm78
  %vm82 = vmand %vm25, %vm79
  %v83 = vsel %vm80, %v65, 0
  %v84 = vsel %vm81, %v66, 0
  %v85 = vsel %vm82, %v67, 0
  %v86 = vpack.c.b16 %v83, %v83
  %v87 = vpack.c.b8 %v86, %v86
  %v88 = vpack.c.b16 %v84, %v84
  %v89 = vpack.c.b8 %v88, %v88
  %v90 = vpack.c.b16 %v85, %v85
  %v91 = vpack.c.b8 %v90, %v90
  %vm92 = vcmask 9216
  %93 = vst.msk [vmem:[%s1] sm:$0x3] %vm92, %v87
  %94 = vst.msk [vmem:[%s1 + $0x2] sm:$0x3] %vm92, %v89
  %vm95 = vcmask 8192
  %vm96 = vsmask.f32 256
  %vm97 = vmand %vm95, %vm96
  %v98 = vld [vmem:[%s1 + $0x4] sm:$0x1]
  %v99 = vsel %vm97, %v91, %v98
  %100 = vst [vmem:[%s1 + $0x4] sm:$0x1] %v99
  %vm101 = vcmp.eq.s32.totalorder %v62, 1
  %vm102 = vcmp.eq.s32.totalorder %v63, 1
  %vm103 = vcmp.eq.s32.totalorder %v64, 1
  %v104 = vrot.slane %v12, 1
  %vm105 = vcmask 1040384
  %v106 = vrot.slane %v10, 7
  %v107 = vrot.slane %v11, 7
  %v108 = vsel %vm105, %v106, %v107
  %v109 = vrot.slane %v12, 7
  %v110 = vsel %vm105, %v107, %v109
  %v111 = vsel %vm105, %v104, %v106
  %v112 = vsel %vm101, %v111, %v10
  %v113 = vsel %vm102, %v108, %v11
  %v114 = vsel %vm103, %v110, %v12
  %vm115 = vcmp.eq.s32.totalorder %v62, 2
  %vm116 = vcmp.eq.s32.totalorder %v63, 2
  %vm117 = vcmp.eq.s32.totalorder %v64, 2
  %vm118 = vcmask 1041408
  %v119 = vrot.slane %v10, 6
  %v120 = vrot.slane %v11, 6
  %v121 = vsel %vm118, %v119, %v120
  %v122 = vsel %vm118, %v12, %v119
  %v123 = vsel %vm115, %v122, %v112
  %v124 = vsel %vm116, %v121, %v113
  %v125 = vsel %vm117, %v120, %v114
  %vm126 = vcmp.eq.s32.totalorder %v62, 3
  %vm127 = vcmp.eq.s32.totalorder %v63, 3
  %vm128 = vcmp.eq.s32.totalorder %v64, 3
  %vm129 = vcmask 1042432
  %v130 = vrot.slane %v10, 5
  %v131 = vrot.slane %v11, 5
  %v132 = vsel %vm129, %v130, %v131
  %v133 = vsel %vm129, %v110, %v130
  %v134 = vsel %vm126, %v133, %v123
  %v135 = vsel %vm127, %v132, %v124
  %v136 = vsel %vm128, %v131, %v125
  %vm137 = vcmp.ne.s32.totalorder %v62, 0
  %vm138 = vcmp.ne.s32.totalorder %v63, 0
  %vm139 = vcmp.ne.s32.totalorder %v64, 0
  %vm140 = vmand %vm23, %vm137
  %vm141 = vmand %vm24, %vm138
  %vm142 = vmand %vm25, %vm139
  %vm143 = vcmp.ne.s32.totalorder %v134, 1
  %vm144 = vcmp.ne.s32.totalorder %v135, 1
  %vm145 = vcmp.ne.s32.totalorder %v136, 1
  %vm146 = vmand %vm140, %vm143
  %vm147 = vmand %vm141, %vm144
  %vm148 = vmand %vm142, %vm145
  %v149 = vsel %vm146, %v134, 0
  %v150 = vsel %vm147, %v135, 0
  %v151 = vsel %vm148, %v136, 0
  %vm152 = vcmask 15360
  %153 = vst.msk [vmem:[%s2] sm:$0xff] %vm152, %v149
  %154 = vst.msk [vmem:[%s2 + $0x8] sm:$0xff] %vm152, %v150
  %155 = vst.msk [vmem:[%s2 + $0x10] sm:$0x3] %vm92, %v151
  // Predicated region
  $region6: #{tpu_custom_call.1} parent=0 // pred_check
    _
  $region7: #{tpu_custom_call.1} parent=0 // pred_check_branch
    %157 = sbr.rel (0) target = $region9
  $region8: #{tpu_custom_call.1} parent=0 // pred_region
    _
  $region9: #{tpu_custom_call.1} parent=0 // pred_fallthru
    _
  // Predicated region
  $region10: #{tpu_custom_call.1} parent=0 // pred_check
    _
  $region11: #{tpu_custom_call.1} parent=0 // pred_check_branch
    %159 = sbr.rel (0) target = $region13
  $region12: #{tpu_custom_call.1} parent=0 // pred_region
    _
  $region13: #{tpu_custom_call.1} parent=0 // pred_fallthru
    _
  // Predicated region
  $region14: #{tpu_custom_call.1} parent=0 // pred_check
    _
  $region15: #{tpu_custom_call.1} parent=0 // pred_check_branch
    %161 = sbr.rel (0) target = $region17
  $region16: #{tpu_custom_call.1} parent=0 // pred_region
    _
  $region17: #{tpu_custom_call.1} parent=0 // pred_fallthru
    _
  // Predicated region
  $region18: #{tpu_custom_call.1} parent=0 // pred_check
    _
  $region19: #{tpu_custom_call.1} parent=0 // pred_check_branch
    %163 = sbr.rel (0) target = $region21
  $region20: #{tpu_custom_call.1} parent=0 // pred_region
    _
  $region21: #{tpu_custom_call.1} parent=0 // pred_fallthru
    _

</llo_original>
